<compile_context>
chip_gen: v5e
topology: v5e:2x2
jax: 0.10.0
libtpu: 0.0.40
codegen_flags: <defaults>
</compile_context>

<pallas_src>
import functools

import jax
import jax.numpy as jnp
import numpy as np
from jax.experimental import pallas as pl
from jax.experimental.pallas import tpu as pltpu

LANE = 128


# ----------------------------------------------------------------------------
# Small helpers
# ----------------------------------------------------------------------------
def _round_up(x, m):
    return ((x + m - 1) // m) * m


def _choose_tile(n, target):
    """Largest multiple of 128 that divides n (n is a multiple of 128), <= target."""
    t = max((min(target, n) // LANE) * LANE, LANE)
    while n % t != 0:
        t -= LANE
    return t


def _pad2d(a, rows, cols):
    return jnp.zeros((rows, cols), a.dtype).at[: a.shape[0], : a.shape[1]].set(a)


def _vmem_budget_bytes():
    """Chip-aware VMEM budget (25% headroom).  Conservative fallback off-TPU."""
    try:
        cap = pltpu.get_tpu_info().vmem_capacity_bytes
    except Exception:
        cap = 64 * 1024 * 1024  # v7x per-TensorCore VMEM (smallest in the fleet)
    return int(cap) * 3 // 4


def _cparams(dims=None, vmem_limit=None):
    kw = {}
    if dims is not None:
        kw["dimension_semantics"] = dims
    if vmem_limit is not None:
        kw["vmem_limit_bytes"] = int(vmem_limit)
    return pltpu.CompilerParams(**kw)


# ----------------------------------------------------------------------------
# Pallas kernels
# ----------------------------------------------------------------------------
def _fused_gnn_kernel(a_ref, x_ref, w1_ref, b1_ref, w2_ref, b2_ref,
                      w3_ref, b3_ref, p_ref, scale_ref, wl_ref, bl_ref, o_ref):
    """All three GCN layers + mean-pool + dropout + Linear, A_hat VMEM-resident."""

    def gcn(h_bf16, w_ref, b_ref, relu):
        xw = jnp.dot(h_bf16, w_ref[...], preferred_element_type=jnp.float32)
        out = jnp.dot(a_ref[...], xw.astype(jnp.bfloat16),
                      preferred_element_type=jnp.float32) + b_ref[...]
        if relu:
            out = jnp.maximum(out, 0.0)
        return out.astype(jnp.bfloat16)

    h = gcn(x_ref[...], w1_ref, b1_ref, True)
    h = gcn(h, w2_ref, b2_ref, True)
    h = gcn(h, w3_ref, b3_ref, False)
    # global_mean_pool: exact 0/1 one-hot sum; 1/|graph| and dropout scale are
    # folded into scale_ref (f32).
    pooled = jnp.dot(p_ref[...], h, preferred_element_type=jnp.float32)
    pooled = pooled * scale_ref[...]
    o_ref[...] = jnp.dot(pooled, wl_ref[...],
                         preferred_element_type=jnp.float32) + bl_ref[...]


def _gcn_stream_kernel(a_ref, x_ref, w_ref, b_ref, o_ref, acc_ref, *, relu, tk):
    """out_row_tile = relu( sum_k A_hat[i,k] @ (X[k] @ W) + b ), X/W resident."""
    k = pl.program_id(1)

    @pl.when(k == 0)
    def _():
        acc_ref[...] = jnp.zeros_like(acc_ref)

    # XW for this K tile, recomputed from the VMEM-resident X and W (no HBM
    # round-trip; the extra MXU flops hide under the A_hat DMA in the
    # memory-bound regime).
    row0 = pl.multiple_of(k * tk, LANE)
    xw_k = jnp.dot(x_ref[pl.ds(row0, tk), :], w_ref[...],
                   preferred_element_type=jnp.float32).astype(jnp.bfloat16)
    acc_ref[...] += jnp.dot(a_ref[...], xw_k, preferred_element_type=jnp.float32)

    @pl.when(k == pl.num_programs(1) - 1)
    def _():
        out = acc_ref[...] + b_ref[...]          # bias in f32
        if relu:
            out = jnp.maximum(out, 0.0)          # ReLU in f32
        o_ref[...] = out.astype(o_ref.dtype)     # cast to bf16 at store


def _pool_dropout_linear_kernel(p_ref, h_ref, scale_ref, w_ref, b_ref, o_ref,
                                acc_ref):
    """pooled = P_onehot @ H (tiled K-reduction); scale (mean + dropout) + Linear."""
    k = pl.program_id(0)

    @pl.when(k == 0)
    def _():
        acc_ref[...] = jnp.zeros_like(acc_ref)

    acc_ref[...] += jnp.dot(p_ref[...], h_ref[...],
                            preferred_element_type=jnp.float32)

    @pl.when(k == pl.num_programs(0) - 1)
    def _():
        pooled = acc_ref[...] * scale_ref[...]
        o_ref[...] = jnp.dot(pooled, w_ref[...],
                             preferred_element_type=jnp.float32) + b_ref[...]


# ----------------------------------------------------------------------------
# Kernel wrappers
# ----------------------------------------------------------------------------
def fused_gnn(a_hat, x, weights, pool_onehot, scale, *, vmem_limit):
    w1, b1, w2, b2, w3, b3, w_lin, b_lin = weights
    n_pad = a_hat.shape[0]
    h_pad = w1.shape[1]
    g_pad, c_pad = pool_onehot.shape[0], w_lin.shape[1]
    return pl.pallas_call(
        _fused_gnn_kernel,
        out_shape=jax.ShapeDtypeStruct((g_pad, c_pad), jnp.float32),
        compiler_params=_cparams(None, vmem_limit),
        cost_estimate=pl.CostEstimate(
            flops=6 * n_pad * n_pad * h_pad + 8 * n_pad * h_pad * h_pad,
            transcendentals=0,
            bytes_accessed=2 * n_pad * n_pad + 2 * n_pad * h_pad
                           + 8 * h_pad * h_pad + 4 * g_pad * c_pad),
    )(a_hat, x, w1, b1, w2, b2, w3, b3, pool_onehot, scale, w_lin, b_lin)


def gcn_layer_stream(a_hat, h, w, b, *, relu, vmem_limit):
    """One GCNConv: relu(A_hat @ (h @ w) + b), A_hat streamed, h/w resident."""
    n_pad = a_hat.shape[0]
    f_in, f_out = w.shape
    tm = _choose_tile(n_pad, 512)      # row tile (review: 256 -> 512)
    tk = _choose_tile(n_pad, 1024)     # K tile   (review: 512 -> 1024)
    return pl.pallas_call(
        functools.partial(_gcn_stream_kernel, relu=relu, tk=tk),
        out_shape=jax.ShapeDtypeStruct((n_pad, f_out), jnp.bfloat16),
        grid_spec=pltpu.PrefetchScalarGridSpec(
            num_scalar_prefetch=0,
            grid=(n_pad // tm, n_pad // tk),
            in_specs=[
                pl.BlockSpec((tm, tk), lambda i, k: (i, k)),        # A_hat (streamed)
                pl.BlockSpec((n_pad, f_in), lambda i, k: (0, 0)),   # X (resident)
                pl.BlockSpec((f_in, f_out), lambda i, k: (0, 0)),   # W (resident)
                pl.BlockSpec((1, f_out), lambda i, k: (0, 0)),      # bias
            ],
            out_specs=pl.BlockSpec((tm, f_out), lambda i, k: (i, 0)),
            scratch_shapes=[pltpu.VMEM((tm, f_out), jnp.float32)],
        ),
        compiler_params=_cparams(("parallel", "arbitrary"), vmem_limit),
        cost_estimate=pl.CostEstimate(
            flops=2 * n_pad * n_pad * f_out
                  + 2 * (n_pad // tm) * n_pad * f_in * f_out,
            transcendentals=0,
            bytes_accessed=2 * n_pad * n_pad + 2 * n_pad * (f_in + f_out)
                           + 2 * f_in * f_out + 4 * f_out),
    )(a_hat, h, w, b)


def pool_dropout_linear_stream(pool_onehot, h, scale, w, b, *, vmem_limit):
    """(P_onehot @ H) * scale @ W_lin + b_lin  (scale = dropout * 1/|graph|)."""
    n_pad, h_dim = h.shape
    g_pad = pool_onehot.shape[0]
    c_pad = w.shape[1]
    tk = _choose_tile(n_pad, 1024)
    return pl.pallas_call(
        _pool_dropout_linear_kernel,
        out_shape=jax.ShapeDtypeStruct((g_pad, c_pad), jnp.float32),
        grid_spec=pltpu.PrefetchScalarGridSpec(
            num_scalar_prefetch=0,
            grid=(n_pad // tk,),
            in_specs=[
                pl.BlockSpec((g_pad, tk), lambda k: (0, k)),
                pl.BlockSpec((tk, h_dim), lambda k: (k, 0)),
                pl.BlockSpec((g_pad, h_dim), lambda k: (0, 0)),
                pl.BlockSpec((h_dim, c_pad), lambda k: (0, 0)),
                pl.BlockSpec((1, c_pad), lambda k: (0, 0)),
            ],
            out_specs=pl.BlockSpec((g_pad, c_pad), lambda k: (0, 0)),
            scratch_shapes=[pltpu.VMEM((g_pad, h_dim), jnp.float32)],
        ),
        compiler_params=_cparams(("arbitrary",), vmem_limit),
        cost_estimate=pl.CostEstimate(
            flops=2 * g_pad * n_pad * h_dim + 2 * g_pad * h_dim * c_pad,
            transcendentals=0,
            bytes_accessed=2 * (g_pad * n_pad + n_pad * h_dim)
                           + 4 * (h_dim * c_pad + c_pad + g_pad * (h_dim + c_pad))),
    )(pool_onehot, h, scale, w, b)


# ----------------------------------------------------------------------------
# Plain-JAX glue: dense normalized adjacency / pooling matrix construction
# ----------------------------------------------------------------------------
def build_normalized_adjacency(edge_index, edge_attr, num_nodes, n_pad):
    """A_hat = D^{-1/2} (A + I) D^{-1/2}, A[dst, src] = weight; zero-padded."""
    src, dst = edge_index[0], edge_index[1]
    a = jnp.zeros((n_pad, n_pad), jnp.float32)
    a = a.at[dst, src].add(edge_attr.astype(jnp.float32))
    idx = jnp.arange(num_nodes)
    a = a.at[idx, idx].add(1.0)                      # self loops (real nodes only)
    deg = jnp.sum(a, axis=1)
    dinv = jnp.where(deg > 0.0, jax.lax.rsqrt(deg), 0.0)
    return dinv[:, None] * a * dinv[None, :]         # padded rows/cols stay zero


def build_pool_onehot(batch, num_graphs, n_pad, g_pad):
    """Exact 0/1 one-hot P[g, i] (bf16-exact) and per-graph node counts (f32)."""
    n = batch.shape[0]
    batch_pad = jnp.full((n_pad,), g_pad, jnp.int32).at[:n].set(batch)
    onehot = (batch_pad[None, :] == jnp.arange(g_pad)[:, None]).astype(jnp.float32)
    counts = jnp.maximum(onehot.sum(axis=1), 1.0)
    return onehot, counts


# ----------------------------------------------------------------------------
# Full forward pass
# ----------------------------------------------------------------------------
def gnn_forward(params, x, edge_index, edge_attr, batch, num_graphs,
                dropout_seed, *, drop_p=0.5, force_path=None):
    n, f_in = x.shape
    hidden = params["w1"].shape[1]
    num_classes = params["w_lin"].shape[1]

    f_pad = _round_up(f_in, LANE)
    h_pad = _round_up(hidden, LANE)
    c_pad = _round_up(num_classes, LANE)
    g_pad = _round_up(max(num_graphs, 8), 8)

    budget = _vmem_budget_bytes()

    # Path selection: fully fused (A_hat resident, one pallas_call) when the
    # working set fits the chip's VMEM, else per-layer streaming.
    n_small = _round_up(max(n, LANE), LANE)
    fused_bytes = (2 * n_small * n_small        # A_hat bf16
                   + 2 * n_small * f_pad        # X bf16
                   + 24 * n_small * h_pad       # intermediates (generous)
                   + (2 << 20))                 # weights / headroom
    if force_path == "fused":
        use_fused = True
    elif force_path == "stream":
        use_fused = False
    else:
        use_fused = fused_bytes <= budget

    # Tile-friendly padding on the streaming path so tiles never collapse to 128.
    n_pad = n_small if use_fused else _round_up(max(n, 512), 512)

    a_hat = build_normalized_adjacency(edge_index, edge_attr, n, n_pad).astype(jnp.bfloat16)
    pool_onehot, counts = build_pool_onehot(batch, num_graphs, n_pad, g_pad)
    p_bf16 = pool_onehot.astype(jnp.bfloat16)        # exact 0/1 in bf16

    # Dropout keep-mask (F.dropout default: p=0.5, training=True).  Built with
    # jax.random (pltpu.prng_* has no CPU/interpret lowering); the 1/(1-p)
    # rescale and the 1/|graph| mean-pool division are folded into one f32
    # scale array applied inside the kernel.
    keep = jax.random.bernoulli(jax.random.PRNGKey(dropout_seed), 1.0 - drop_p,
                                (g_pad, h_pad)).astype(jnp.float32)
    scale = (keep / (1.0 - drop_p)) / counts[:, None]

    x_p = _pad2d(x.astype(jnp.float32), n_pad, f_pad).astype(jnp.bfloat16)
    w1 = _pad2d(params["w1"], f_pad, h_pad).astype(jnp.bfloat16)
    w2 = _pad2d(params["w2"], h_pad, h_pad).astype(jnp.bfloat16)
    w3 = _pad2d(params["w3"], h_pad, h_pad).astype(jnp.bfloat16)
    b1 = _pad2d(params["b1"], 1, h_pad)              # biases stay f32
    b2 = _pad2d(params["b2"], 1, h_pad)
    b3 = _pad2d(params["b3"], 1, h_pad)
    w_lin = _pad2d(params["w_lin"], h_pad, c_pad)    # tiny, keep f32
    b_lin = _pad2d(params["b_lin"], 1, c_pad)

    if use_fused:
        out = fused_gnn(a_hat, x_p,
                        (w1, b1, w2, b2, w3, b3, w_lin, b_lin),
                        p_bf16, scale, vmem_limit=budget)
    else:
        h = gcn_layer_stream(a_hat, x_p, w1, b1, relu=True, vmem_limit=budget)
        h = gcn_layer_stream(a_hat, h, w2, b2, relu=True, vmem_limit=budget)
        h = gcn_layer_stream(a_hat, h, w3, b3, relu=False, vmem_limit=budget)
        out = pool_dropout_linear_stream(p_bf16, h, scale, w_lin, b_lin,
                                         vmem_limit=budget)
    return out[:num_graphs, :num_classes]


# ----------------------------------------------------------------------------
# Deterministic parameter init (shapes from GNN.__init__)
# ----------------------------------------------------------------------------
def init_params(key, num_node_features, hidden_channels, num_classes):
    ks = jax.random.split(key, 8)
    scale = 0.1
    return {
        "w1": scale * jax.random.normal(ks[0], (num_node_features, hidden_channels), jnp.float32),
        "b1": jnp.zeros((1, hidden_channels), jnp.float32),
        "w2": scale * jax.random.normal(ks[1], (hidden_channels, hidden_channels), jnp.float32),
        "b2": jnp.zeros((1, hidden_channels), jnp.float32),
        "w3": scale * jax.random.normal(ks[2], (hidden_channels, hidden_channels), jnp.float32),
        "b3": jnp.zeros((1, hidden_channels), jnp.float32),
        "w_lin": scale * jax.random.normal(ks[3], (hidden_channels, num_classes), jnp.float32),
        "b_lin": scale * jax.random.normal(ks[4], (1, num_classes), jnp.float32),
    }


if __name__ == "__main__":
    key = jax.random.PRNGKey(0)
    k_param, k_x, k_e = jax.random.split(key, 3)

    # Small synthetic graph batch: 2 graphs, 8 nodes each (N=16), 4 node
    # features, hidden=32, 3 classes.
    num_node_features = 4
    hidden_channels = 32
    num_classes = 3
    nodes_per_graph = 8
    num_graphs = 2
    n = nodes_per_graph * num_graphs

    x = jax.random.normal(k_x, (n, num_node_features), jnp.float32)

    # Ring edges within each graph, both directions.
    srcs, dsts = [], []
    for g in range(num_graphs):
        base = g * nodes_per_graph
        for i in range(nodes_per_graph):
            a, b = base + i, base + (i + 1) % nodes_per_graph
            srcs += [a, b]
            dsts += [b, a]
    edge_index = jnp.array([srcs, dsts], dtype=jnp.int32)
    edge_attr = jax.random.uniform(k_e, (edge_index.shape[1],), jnp.float32,
                                   minval=0.1, maxval=1.0)
    batch = jnp.repeat(jnp.arange(num_graphs, dtype=jnp.int32), nodes_per_graph)

    params = init_params(k_param, num_node_features, hidden_channels, num_classes)

    # Run both paths once (fused is what the auto-selector picks at this size;
    # the streaming path is exercised too and must agree).
    out_fused = jax.block_until_ready(
        gnn_forward(params, x, edge_index, edge_attr, batch, num_graphs,
                    dropout_seed=0, force_path="fused"))
    out_stream = jax.block_until_ready(
        gnn_forward(params, x, edge_index, edge_attr, batch, num_graphs,
                    dropout_seed=0, force_path="stream"))

    assert out_fused.shape == (num_graphs, num_classes), out_fused.shape
    assert out_stream.shape == (num_graphs, num_classes), out_stream.shape
    assert bool(jnp.all(jnp.isfinite(out_fused)))
    assert bool(jnp.all(jnp.isfinite(out_stream)))
    assert np.allclose(np.asarray(out_fused), np.asarray(out_stream),
                       rtol=2e-2, atol=2e-2), (out_fused, out_stream)
    print("KERNEL_OK")
</pallas_src>

<mosaic_0001>
module attributes {stable_mosaic.version = 11 : i64} {
  func.func @_fused_gnn_kernel(%arg0: memref<128x128xbf16, #tpu.memory_space<vmem>>, %arg1: memref<128x128xbf16, #tpu.memory_space<vmem>>, %arg2: memref<128x128xbf16, #tpu.memory_space<vmem>>, %arg3: memref<1x128xf32, #tpu.memory_space<vmem>>, %arg4: memref<128x128xbf16, #tpu.memory_space<vmem>>, %arg5: memref<1x128xf32, #tpu.memory_space<vmem>>, %arg6: memref<128x128xbf16, #tpu.memory_space<vmem>>, %arg7: memref<1x128xf32, #tpu.memory_space<vmem>>, %arg8: memref<8x128xbf16, #tpu.memory_space<vmem>>, %arg9: memref<8x128xf32, #tpu.memory_space<vmem>>, %arg10: memref<128x128xf32, #tpu.memory_space<vmem>>, %arg11: memref<1x128xf32, #tpu.memory_space<vmem>>, %arg12: memref<8x128xf32, #tpu.memory_space<vmem>>) attributes {dimension_semantics = [], scalar_prefetch = 0 : i64, scratch_operands = 0 : i64, tpu.core_type = #tpu.core_type<tc>} {
    %c0 = arith.constant 0 : index
    %c0_0 = arith.constant 0 : index
    %0 = vector.load %arg1[%c0, %c0_0] : memref<128x128xbf16, #tpu.memory_space<vmem>>, vector<128x128xbf16>
    %c0_1 = arith.constant 0 : index
    %c0_2 = arith.constant 0 : index
    %1 = vector.load %arg2[%c0_1, %c0_2] : memref<128x128xbf16, #tpu.memory_space<vmem>>, vector<128x128xbf16>
    %cst = arith.constant dense<0.000000e+00> : vector<128x128xf32>
    %2 = tpu.matmul %0, %1, %cst {dimension_numbers = #tpu.dot_dimension_numbers<[1], [0], [0], [1], [0, 0, 1, 1], [], []>} : vector<128x128xbf16>, vector<128x128xbf16>, vector<128x128xf32> -> vector<128x128xf32>
    %c0_3 = arith.constant 0 : index
    %c0_4 = arith.constant 0 : index
    %3 = vector.load %arg0[%c0_3, %c0_4] : memref<128x128xbf16, #tpu.memory_space<vmem>>, vector<128x128xbf16>
    %4 = arith.truncf %2 : vector<128x128xf32> to vector<128x128xbf16>
    %cst_5 = arith.constant dense<0.000000e+00> : vector<128x128xf32>
    %5 = tpu.matmul %3, %4, %cst_5 {dimension_numbers = #tpu.dot_dimension_numbers<[1], [0], [0], [1], [0, 0, 1, 1], [], []>} : vector<128x128xbf16>, vector<128x128xbf16>, vector<128x128xf32> -> vector<128x128xf32>
    %c0_6 = arith.constant 0 : index
    %c0_7 = arith.constant 0 : index
    %6 = vector.load %arg3[%c0_6, %c0_7] : memref<1x128xf32, #tpu.memory_space<vmem>>, vector<1x128xf32>
    %7 = vector.broadcast %6 : vector<1x128xf32> to vector<128x128xf32>
    %8 = arith.addf %5, %7 : vector<128x128xf32>
    %cst_8 = arith.constant 0.000000e+00 : f32
    %9 = vector.broadcast %cst_8 : f32 to vector<128x128xf32>
    %10 = arith.maximumf %8, %9 : vector<128x128xf32>
    %11 = arith.truncf %10 : vector<128x128xf32> to vector<128x128xbf16>
    %c0_9 = arith.constant 0 : index
    %c0_10 = arith.constant 0 : index
    %12 = vector.load %arg4[%c0_9, %c0_10] : memref<128x128xbf16, #tpu.memory_space<vmem>>, vector<128x128xbf16>
    %cst_11 = arith.constant dense<0.000000e+00> : vector<128x128xf32>
    %13 = tpu.matmul %11, %12, %cst_11 {dimension_numbers = #tpu.dot_dimension_numbers<[1], [0], [0], [1], [0, 0, 1, 1], [], []>} : vector<128x128xbf16>, vector<128x128xbf16>, vector<128x128xf32> -> vector<128x128xf32>
    %c0_12 = arith.constant 0 : index
    %c0_13 = arith.constant 0 : index
    %14 = vector.load %arg0[%c0_12, %c0_13] : memref<128x128xbf16, #tpu.memory_space<vmem>>, vector<128x128xbf16>
    %15 = arith.truncf %13 : vector<128x128xf32> to vector<128x128xbf16>
    %cst_14 = arith.constant dense<0.000000e+00> : vector<128x128xf32>
    %16 = tpu.matmul %14, %15, %cst_14 {dimension_numbers = #tpu.dot_dimension_numbers<[1], [0], [0], [1], [0, 0, 1, 1], [], []>} : vector<128x128xbf16>, vector<128x128xbf16>, vector<128x128xf32> -> vector<128x128xf32>
    %c0_15 = arith.constant 0 : index
    %c0_16 = arith.constant 0 : index
    %17 = vector.load %arg5[%c0_15, %c0_16] : memref<1x128xf32, #tpu.memory_space<vmem>>, vector<1x128xf32>
    %18 = vector.broadcast %17 : vector<1x128xf32> to vector<128x128xf32>
    %19 = arith.addf %16, %18 : vector<128x128xf32>
    %cst_17 = arith.constant 0.000000e+00 : f32
    %20 = vector.broadcast %cst_17 : f32 to vector<128x128xf32>
    %21 = arith.maximumf %19, %20 : vector<128x128xf32>
    %22 = arith.truncf %21 : vector<128x128xf32> to vector<128x128xbf16>
    %c0_18 = arith.constant 0 : index
    %c0_19 = arith.constant 0 : index
    %23 = vector.load %arg6[%c0_18, %c0_19] : memref<128x128xbf16, #tpu.memory_space<vmem>>, vector<128x128xbf16>
    %cst_20 = arith.constant dense<0.000000e+00> : vector<128x128xf32>
    %24 = tpu.matmul %22, %23, %cst_20 {dimension_numbers = #tpu.dot_dimension_numbers<[1], [0], [0], [1], [0, 0, 1, 1], [], []>} : vector<128x128xbf16>, vector<128x128xbf16>, vector<128x128xf32> -> vector<128x128xf32>
    %c0_21 = arith.constant 0 : index
    %c0_22 = arith.constant 0 : index
    %25 = vector.load %arg0[%c0_21, %c0_22] : memref<128x128xbf16, #tpu.memory_space<vmem>>, vector<128x128xbf16>
    %26 = arith.truncf %24 : vector<128x128xf32> to vector<128x128xbf16>
    %cst_23 = arith.constant dense<0.000000e+00> : vector<128x128xf32>
    %27 = tpu.matmul %25, %26, %cst_23 {dimension_numbers = #tpu.dot_dimension_numbers<[1], [0], [0], [1], [0, 0, 1, 1], [], []>} : vector<128x128xbf16>, vector<128x128xbf16>, vector<128x128xf32> -> vector<128x128xf32>
    %c0_24 = arith.constant 0 : index
    %c0_25 = arith.constant 0 : index
    %28 = vector.load %arg7[%c0_24, %c0_25] : memref<1x128xf32, #tpu.memory_space<vmem>>, vector<1x128xf32>
    %29 = vector.broadcast %28 : vector<1x128xf32> to vector<128x128xf32>
    %30 = arith.addf %27, %29 : vector<128x128xf32>
    %31 = arith.truncf %30 : vector<128x128xf32> to vector<128x128xbf16>
    %c0_26 = arith.constant 0 : index
    %c0_27 = arith.constant 0 : index
    %32 = vector.load %arg8[%c0_26, %c0_27] : memref<8x128xbf16, #tpu.memory_space<vmem>>, vector<8x128xbf16>
    %cst_28 = arith.constant dense<0.000000e+00> : vector<8x128xf32>
    %33 = tpu.matmul %32, %31, %cst_28 {dimension_numbers = #tpu.dot_dimension_numbers<[1], [0], [0], [1], [0, 0, 1, 1], [], []>} : vector<8x128xbf16>, vector<128x128xbf16>, vector<8x128xf32> -> vector<8x128xf32>
    %c0_29 = arith.constant 0 : index
    %c0_30 = arith.constant 0 : index
    %34 = vector.load %arg9[%c0_29, %c0_30] : memref<8x128xf32, #tpu.memory_space<vmem>>, vector<8x128xf32>
    %35 = arith.mulf %33, %34 : vector<8x128xf32>
    %c0_31 = arith.constant 0 : index
    %c0_32 = arith.constant 0 : index
    %36 = vector.load %arg10[%c0_31, %c0_32] : memref<128x128xf32, #tpu.memory_space<vmem>>, vector<128x128xf32>
    %cst_33 = arith.constant dense<0.000000e+00> : vector<8x128xf32>
    %37 = tpu.matmul %35, %36, %cst_33 {dimension_numbers = #tpu.dot_dimension_numbers<[1], [0], [0], [1], [0, 0, 1, 1], [], []>} : vector<8x128xf32>, vector<128x128xf32>, vector<8x128xf32> -> vector<8x128xf32>
    %c0_34 = arith.constant 0 : index
    %c0_35 = arith.constant 0 : index
    %38 = vector.load %arg11[%c0_34, %c0_35] : memref<1x128xf32, #tpu.memory_space<vmem>>, vector<1x128xf32>
    %39 = vector.broadcast %38 : vector<1x128xf32> to vector<8x128xf32>
    %40 = arith.addf %37, %39 : vector<8x128xf32>
    %c0_36 = arith.constant 0 : index
    %c0_37 = arith.constant 0 : index
    %41 = vector.load %arg12[%c0_36, %c0_37] : memref<8x128xf32, #tpu.memory_space<vmem>>, vector<8x128xf32>
    tpu.vector_store %arg12[%c0_36, %c0_37], %40 {strides = array<i32>} : memref<8x128xf32, #tpu.memory_space<vmem>>, vector<8x128xf32>,
    return
  }
}

</mosaic_0001>

<llo_original>
// kernel: tpu_custom_call.1
$region0: #{tpu_custom_call.1}
  #allocation0 [shape = 'u32[]', space=smem, size = 0x4, offset = 0x4, fixed_abs, tag = 'smem constant byte address 0x4 - core index']
  #allocation1 [shape = 'u32[72,128]{1,0:T(1,128)}', space=vmem, size = 0x9000, scoped, tag = 'internal scratch']
  %s0 = inlined_call_operand.hbm [shape: bf16[128,128], index: 0, kind: input, shape index: {}]
  %s1 = inlined_call_operand.hbm [shape: bf16[128,128], index: 1, kind: input, shape index: {}]
  %s2 = inlined_call_operand.hbm [shape: bf16[128,128], index: 2, kind: input, shape index: {}]
  %s3 = inlined_call_operand.hbm [shape: f32[1,128], index: 3, kind: input, shape index: {}]
  %s4 = inlined_call_operand.hbm [shape: bf16[128,128], index: 4, kind: input, shape index: {}]
  %s5 = inlined_call_operand.hbm [shape: f32[1,128], index: 5, kind: input, shape index: {}]
  %s6 = inlined_call_operand.hbm [shape: bf16[128,128], index: 6, kind: input, shape index: {}]
  %s7 = inlined_call_operand.hbm [shape: f32[1,128], index: 7, kind: input, shape index: {}]
  %s8 = inlined_call_operand.hbm [shape: bf16[8,128], index: 8, kind: input, shape index: {}]
  %s9 = inlined_call_operand.vmem [shape: f32[8,128], index: 9, kind: input, shape index: {}]
  %s10 = inlined_call_operand.hbm [shape: f32[128,128], index: 10, kind: input, shape index: {}]
  %s11 = inlined_call_operand.vmem [shape: f32[1,128], index: 11, kind: input, shape index: {}]
  %s12 = inlined_call_operand.hbm [shape: f32[8,128], index: 12, kind: output, shape index: {}]
  %s13 = sld [smem:[#allocation0]]
  $region98: #{tpu_custom_call.1} parent=0
    _
  %s15 = ssub.s32 1, %s13
  %s16 = scalar_select 0, %s15, %s13
  $region1: #{tpu_custom_call.1} parent=0
    #allocation2 [shape = 'u8[32768]{0}', space=vmem, size = 0x8000, scoped, tag = 'input window, operand 0, single buffered']
    #allocation3 [shape = 's32[1]{0}', space=sflag, size = 0x4, scoped, tag = 'scoped memory for tpu_custom_call.1']
    #allocation4 [shape = 's32[1]{0}', space=sflag, size = 0x4, scoped, tag = 'scoped memory for tpu_custom_call.1']
    #allocation5 [shape = 'u8[32768]{0}', space=vmem, size = 0x8000, scoped, tag = 'input window, operand 1, single buffered']
    #allocation6 [shape = 's32[1]{0}', space=sflag, size = 0x4, scoped, tag = 'scoped memory for tpu_custom_call.1']
    #allocation7 [shape = 'u8[32768]{0}', space=vmem, size = 0x8000, scoped, tag = 'input window, operand 2, single buffered']
    #allocation8 [shape = 'u8[512]{0}', space=vmem, size = 0x400, scoped, tag = 'input window, operand 3, single buffered']
    #allocation9 [shape = 's32[1]{0}', space=sflag, size = 0x4, scoped, tag = 'scoped memory for tpu_custom_call.1']
    #allocation10 [shape = 'u8[32768]{0}', space=vmem, size = 0x8000, scoped, tag = 'input window, operand 4, single buffered']
    #allocation11 [shape = 'u8[512]{0}', space=vmem, size = 0x400, scoped, tag = 'input window, operand 5, single buffered']
    #allocation12 [shape = 's32[1]{0}', space=sflag, size = 0x4, scoped, tag = 'scoped memory for tpu_custom_call.1']
    #allocation13 [shape = 'u8[32768]{0}', space=vmem, size = 0x8000, scoped, tag = 'input window, operand 6, single buffered']
    #allocation14 [shape = 'u8[512]{0}', space=vmem, size = 0x400, scoped, tag = 'input window, operand 7, single buffered']
    #allocation15 [shape = 's32[1]{0}', space=sflag, size = 0x4, scoped, tag = 'scoped memory for tpu_custom_call.1']
    #allocation16 [shape = 'u8[2048]{0}', space=vmem, size = 0x800, scoped, tag = 'input window, operand 8, single buffered']
    #allocation17 [shape = 'u8[65536]{0}', space=vmem, size = 0x10000, scoped, tag = 'input window, operand 10, single buffered']
    #allocation18 [shape = 's32[1]{0}', space=sflag, size = 0x4, scoped, tag = 'scoped memory for tpu_custom_call.1']
    #allocation19 [shape = 'u8[4096]{0}', space=vmem, size = 0x1000, scoped, tag = 'output window, operand 0, single buffered']
    %17 = vsyncpa [#allocation3], 0
    %18 = vsyncpa [#allocation6], 0
    %19 = vsyncpa [#allocation9], 0
    %20 = vsyncpa [#allocation12], 0
    %21 = vsyncpa [#allocation15], 0
    %22 = vsyncpa [#allocation18], 0
    %23 = vsyncpa [#allocation4], 0
    // Predicated region
    $region2: #{tpu_custom_call.1} parent=1 // pred_check
      _
    $region3: #{tpu_custom_call.1} parent=1 // pred_check_branch
      %25 = sbr.rel (0) target = $region5
    $region4: #{tpu_custom_call.1} parent=1 // pred_region
      %27 = vsyncadd [#allocation3], 0
      %s28 = sshll.u32 %s0, 4
      %s29 = int_to_ptr.hbm [resolvable:$true] %s28
      %s30 = sshll.u32 [#allocation2], 4
      %s31 = int_to_ptr.vmem [resolvable:$true] %s30
      %36 = dma.hbm_to_vmem [thread:$0]  %s29, 1024, %s31, [#allocation3], 64, 64, 4
    $region5: #{tpu_custom_call.1} parent=1 // pred_fallthru
      _
    // Predicated region
    $region6: #{tpu_custom_call.1} parent=1 // pred_check
      _
    $region7: #{tpu_custom_call.1} parent=1 // pred_check_branch
      %38 = sbr.rel (0) target = $region9
    $region8: #{tpu_custom_call.1} parent=1 // pred_region
      %40 = vsyncadd [#allocation6], 0
      %s41 = sshll.u32 %s1, 4
      %s42 = int_to_ptr.hbm [resolvable:$true] %s41
      %s43 = sshll.u32 [#allocation5], 4
      %s44 = int_to_ptr.vmem [resolvable:$true] %s43
      %49 = dma.hbm_to_vmem [thread:$0]  %s42, 1024, %s44, [#allocation6], 64, 64, 4
    $region9: #{tpu_custom_call.1} parent=1 // pred_fallthru
      _
    // Predicated region
    $region10: #{tpu_custom_call.1} parent=1 // pred_check
      _
    $region11: #{tpu_custom_call.1} parent=1 // pred_check_branch
      %51 = sbr.rel (0) target = $region13
    $region12: #{tpu_custom_call.1} parent=1 // pred_region
      %53 = vsyncadd [#allocation6], 0
      %s54 = sshll.u32 %s2, 4
      %s55 = int_to_ptr.hbm [resolvable:$true] %s54
      %s56 = sshll.u32 [#allocation7], 4
      %s57 = int_to_ptr.vmem [resolvable:$true] %s56
      %62 = dma.hbm_to_vmem [thread:$0]  %s55, 1024, %s57, [#allocation6], 64, 64, 4
    $region13: #{tpu_custom_call.1} parent=1 // pred_fallthru
      _
    // Predicated region
    $region14: #{tpu_custom_call.1} parent=1 // pred_check
      _
    $region15: #{tpu_custom_call.1} parent=1 // pred_check_branch
      %64 = sbr.rel (0) target = $region17
    $region16: #{tpu_custom_call.1} parent=1 // pred_region
      %66 = vsyncadd [#allocation9], 0
      %s68 = sshll.u32 %s3, 4
      %s69 = int_to_ptr.hbm [resolvable:$true] %s68
      %s70 = sshll.u32 [#allocation8], 4
      %s71 = int_to_ptr.vmem [resolvable:$true] %s70
      %73 = dma.hbm_to_vmem [thread:$0]  %s69, 16, %s71, [#allocation9]
    $region17: #{tpu_custom_call.1} parent=1 // pred_fallthru
      _
    // Predicated region
    $region18: #{tpu_custom_call.1} parent=1 // pred_check
      _
    $region19: #{tpu_custom_call.1} parent=1 // pred_check_branch
      %75 = sbr.rel (0) target = $region21
    $region20: #{tpu_custom_call.1} parent=1 // pred_region
      %77 = vsyncadd [#allocation9], 0
      %s78 = sshll.u32 %s4, 4
      %s79 = int_to_ptr.hbm [resolvable:$true] %s78
      %s80 = sshll.u32 [#allocation10], 4
      %s81 = int_to_ptr.vmem [resolvable:$true] %s80
      %86 = dma.hbm_to_vmem [thread:$0]  %s79, 1024, %s81, [#allocation9], 64, 64, 4
    $region21: #{tpu_custom_call.1} parent=1 // pred_fallthru
      _
    // Predicated region
    $region22: #{tpu_custom_call.1} parent=1 // pred_check
      _
    $region23: #{tpu_custom_call.1} parent=1 // pred_check_branch
      %88 = sbr.rel (0) target = $region25
    $region24: #{tpu_custom_call.1} parent=1 // pred_region
      %90 = vsyncadd [#allocation12], 0
      %s92 = sshll.u32 %s5, 4
      %s93 = int_to_ptr.hbm [resolvable:$true] %s92
      %s94 = sshll.u32 [#allocation11], 4
      %s95 = int_to_ptr.vmem [resolvable:$true] %s94
      %97 = dma.hbm_to_vmem [thread:$0]  %s93, 16, %s95, [#allocation12]
    $region25: #{tpu_custom_call.1} parent=1 // pred_fallthru
      _
    // Predicated region
    $region26: #{tpu_custom_call.1} parent=1 // pred_check
      _
    $region27: #{tpu_custom_call.1} parent=1 // pred_check_branch
      %99 = sbr.rel (0) target = $region29
    $region28: #{tpu_custom_call.1} parent=1 // pred_region
      %101 = vsyncadd [#allocation12], 0
      %s102 = sshll.u32 %s6, 4
      %s103 = int_to_ptr.hbm [resolvable:$true] %s102
      %s104 = sshll.u32 [#allocation13], 4
      %s105 = int_to_ptr.vmem [resolvable:$true] %s104
      %110 = dma.hbm_to_vmem [thread:$0]  %s103, 1024, %s105, [#allocation12], 64, 64, 4
    $region29: #{tpu_custom_call.1} parent=1 // pred_fallthru
      _
    // Predicated region
    $region30: #{tpu_custom_call.1} parent=1 // pred_check
      _
    $region31: #{tpu_custom_call.1} parent=1 // pred_check_branch
      %112 = sbr.rel (0) target = $region33
    $region32: #{tpu_custom_call.1} parent=1 // pred_region
      %114 = vsyncadd [#allocation15], 0
      %s116 = sshll.u32 %s7, 4
      %s117 = int_to_ptr.hbm [resolvable:$true] %s116
      %s118 = sshll.u32 [#allocation14], 4
      %s119 = int_to_ptr.vmem [resolvable:$true] %s118
      %121 = dma.hbm_to_vmem [thread:$0]  %s117, 16, %s119, [#allocation15]
    $region33: #{tpu_custom_call.1} parent=1 // pred_fallthru
      _
    // Predicated region
    $region34: #{tpu_custom_call.1} parent=1 // pred_check
      _
    $region35: #{tpu_custom_call.1} parent=1 // pred_check_branch
      %123 = sbr.rel (0) target = $region37
    $region36: #{tpu_custom_call.1} parent=1 // pred_region
      %125 = vsyncadd [#allocation15], 0
      %s127 = sshll.u32 %s8, 4
      %s128 = int_to_ptr.hbm [resolvable:$true] %s127
      %s129 = sshll.u32 [#allocation16], 4
      %s130 = int_to_ptr.vmem [resolvable:$true] %s129
      %132 = dma.hbm_to_vmem [thread:$0]  %s128, 64, %s130, [#allocation15]
    $region37: #{tpu_custom_call.1} parent=1 // pred_fallthru
      _
    // Predicated region
    $region38: #{tpu_custom_call.1} parent=1 // pred_check
      _
    $region39: #{tpu_custom_call.1} parent=1 // pred_check_branch
      %134 = sbr.rel (0) target = $region41
    $region40: #{tpu_custom_call.1} parent=1 // pred_region
      _
    $region41: #{tpu_custom_call.1} parent=1 // pred_fallthru
      _
    // Predicated region
    $region42: #{tpu_custom_call.1} parent=1 // pred_check
      _
    $region43: #{tpu_custom_call.1} parent=1 // pred_check_branch
      %136 = sbr.rel (0) target = $region45
    $region44: #{tpu_custom_call.1} parent=1 // pred_region
      %138 = vsyncadd [#allocation18], 0
      %s139 = sshll.u32 %s10, 4
      %s140 = int_to_ptr.hbm [resolvable:$true] %s139
      %s141 = sshll.u32 [#allocation17], 4
      %s142 = int_to_ptr.vmem [resolvable:$true] %s141
      %147 = dma.hbm_to_vmem [thread:$0]  %s140, 2048, %s142, [#allocation18], 128, 128, 8
    $region45: #{tpu_custom_call.1} parent=1 // pred_fallthru
      _
    // Predicated region
    $region46: #{tpu_custom_call.1} parent=1 // pred_check
      _
    $region47: #{tpu_custom_call.1} parent=1 // pred_check_branch
      %149 = sbr.rel (0) target = $region49
    $region48: #{tpu_custom_call.1} parent=1 // pred_region
      _
    $region49: #{tpu_custom_call.1} parent=1 // pred_fallthru
      _
    // Predicated region
    $region50: #{tpu_custom_call.1} parent=1 // pred_check
      _
    $region51: #{tpu_custom_call.1} parent=1 // pred_check_branch
      %151 = sbr.rel (0) target = $region53
    $region52: #{tpu_custom_call.1} parent=1 // pred_region
      %153 = dma.done [#allocation3], 1024
    $region53: #{tpu_custom_call.1} parent=1 // pred_fallthru
      _
    // Predicated region
    $region54: #{tpu_custom_call.1} parent=1 // pred_check
      _
    $region55: #{tpu_custom_call.1} parent=1 // pred_check_branch
      %155 = sbr.rel (0) target = $region57
    $region56: #{tpu_custom_call.1} parent=1 // pred_region
      %157 = dma.done [#allocation6], 1024
    $region57: #{tpu_custom_call.1} parent=1 // pred_fallthru
      _
    // Predicated region
    $region58: #{tpu_custom_call.1} parent=1 // pred_check
      _
    $region59: #{tpu_custom_call.1} parent=1 // pred_check_branch
      %159 = sbr.rel (0) target = $region61
    $region60: #{tpu_custom_call.1} parent=1 // pred_region
      %161 = dma.done [#allocation6], 1024
    $region61: #{tpu_custom_call.1} parent=1 // pred_fallthru
      _
    // Predicated region
    $region62: #{tpu_custom_call.1} parent=1 // pred_check
      _
    $region63: #{tpu_custom_call.1} parent=1 // pred_check_branch
      %163 = sbr.rel (0) target = $region65
    $region64: #{tpu_custom_call.1} parent=1 // pred_region
      %165 = dma.done [#allocation9], 16
    $region65: #{tpu_custom_call.1} parent=1 // pred_fallthru
      _
    // Predicated region
    $region66: #{tpu_custom_call.1} parent=1 // pred_check
      _
    $region67: #{tpu_custom_call.1} parent=1 // pred_check_branch
      %167 = sbr.rel (0) target = $region69
    $region68: #{tpu_custom_call.1} parent=1 // pred_region
      %169 = dma.done [#allocation9], 1024
    $region69: #{tpu_custom_call.1} parent=1 // pred_fallthru
      _
    // Predicated region
    $region70: #{tpu_custom_call.1} parent=1 // pred_check
      _
    $region71: #{tpu_custom_call.1} parent=1 // pred_check_branch
      %171 = sbr.rel (0) target = $region73
    $region72: #{tpu_custom_call.1} parent=1 // pred_region
      %173 = dma.done [#allocation12], 16
    $region73: #{tpu_custom_call.1} parent=1 // pred_fallthru
      _
    // Predicated region
    $region74: #{tpu_custom_call.1} parent=1 // pred_check
      _
    $region75: #{tpu_custom_call.1} parent=1 // pred_check_branch
      %175 = sbr.rel (0) target = $region77
    $region76: #{tpu_custom_call.1} parent=1 // pred_region
      %177 = dma.done [#allocation12], 1024
    $region77: #{tpu_custom_call.1} parent=1 // pred_fallthru
      _
    // Predicated region
    $region78: #{tpu_custom_call.1} parent=1 // pred_check
      _
    $region79: #{tpu_custom_call.1} parent=1 // pred_check_branch
      %179 = sbr.rel (0) target = $region81
    $region80: #{tpu_custom_call.1} parent=1 // pred_region
      %181 = dma.done [#allocation15], 16
    $region81: #{tpu_custom_call.1} parent=1 // pred_fallthru
      _
    // Predicated region
    $region82: #{tpu_custom_call.1} parent=1 // pred_check
      _
    $region83: #{tpu_custom_call.1} parent=1 // pred_check_branch
      %183 = sbr.rel (0) target = $region85
    $region84: #{tpu_custom_call.1} parent=1 // pred_region
      %185 = dma.done [#allocation15], 64
    $region85: #{tpu_custom_call.1} parent=1 // pred_fallthru
      _
    // Predicated region
    $region86: #{tpu_custom_call.1} parent=1 // pred_check
      _
    $region87: #{tpu_custom_call.1} parent=1 // pred_check_branch
      %187 = sbr.rel (0) target = $region89
    $region88: #{tpu_custom_call.1} parent=1 // pred_region
      %189 = dma.done [#allocation18], 2048
    $region89: #{tpu_custom_call.1} parent=1 // pred_fallthru
      _
    %v190 = vld [vmem:[#allocation5] sm:$0xf]
    %v191 = vld [vmem:[#allocation5 + $0x4] sm:$0xf]
    %v192 = vld [vmem:[#allocation5 + $0x8] sm:$0xf]
    %v193 = vld [vmem:[#allocation5 + $0xc] sm:$0xf]
    %v194 = vld [vmem:[#allocation5 + $0x10] sm:$0xf]
    %v195 = vld [vmem:[#allocation5 + $0x14] sm:$0xf]
    %v196 = vld [vmem:[#allocation5 + $0x18] sm:$0xf]
    %v197 = vld [vmem:[#allocation5 + $0x1c] sm:$0xf]
    %v198 = vld [vmem:[#allocation5 + $0x20] sm:$0xf]
    %v199 = vld [vmem:[#allocation5 + $0x24] sm:$0xf]
    %v200 = vld [vmem:[#allocation5 + $0x28] sm:$0xf]
    %v201 = vld [vmem:[#allocation5 + $0x2c] sm:$0xf]
    %v202 = vld [vmem:[#allocation5 + $0x30] sm:$0xf]
    %v203 = vld [vmem:[#allocation5 + $0x34] sm:$0xf]
    %v204 = vld [vmem:[#allocation5 + $0x38] sm:$0xf]
    %v205 = vld [vmem:[#allocation5 + $0x3c] sm:$0xf]
    %v206 = vld [vmem:[#allocation7] sm:$0xf]
    %v207 = vld [vmem:[#allocation7 + $0x4] sm:$0xf]
    %v208 = vld [vmem:[#allocation7 + $0x8] sm:$0xf]
    %v209 = vld [vmem:[#allocation7 + $0xc] sm:$0xf]
    %v210 = vld [vmem:[#allocation7 + $0x10] sm:$0xf]
    %v211 = vld [vmem:[#allocation7 + $0x14] sm:$0xf]
    %v212 = vld [vmem:[#allocation7 + $0x18] sm:$0xf]
    %v213 = vld [vmem:[#allocation7 + $0x1c] sm:$0xf]
    %v214 = vld [vmem:[#allocation7 + $0x20] sm:$0xf]
    %v215 = vld [vmem:[#allocation7 + $0x24] sm:$0xf]
    %v216 = vld [vmem:[#allocation7 + $0x28] sm:$0xf]
    %v217 = vld [vmem:[#allocation7 + $0x2c] sm:$0xf]
    %v218 = vld [vmem:[#allocation7 + $0x30] sm:$0xf]
    %v219 = vld [vmem:[#allocation7 + $0x34] sm:$0xf]
    %v220 = vld [vmem:[#allocation7 + $0x38] sm:$0xf]
    %v221 = vld [vmem:[#allocation7 + $0x3c] sm:$0xf]
    %v238 = vunpack.c.l.b16 %v190
    %v239 = vunpack.c.l.b16 %v191
    %v240 = vunpack.c.l.b16 %v192
    %v241 = vunpack.c.l.b16 %v193
    %v242 = vunpack.c.l.b16 %v194
    %v243 = vunpack.c.l.b16 %v195
    %v244 = vunpack.c.l.b16 %v196
    %v245 = vunpack.c.l.b16 %v197
    %v246 = vunpack.c.l.b16 %v198
    %v247 = vunpack.c.l.b16 %v199
    %v248 = vunpack.c.l.b16 %v200
    %v249 = vunpack.c.l.b16 %v201
    %v250 = vunpack.c.l.b16 %v202
    %v251 = vunpack.c.l.b16 %v203
    %v252 = vunpack.c.l.b16 %v204
    %v253 = vunpack.c.l.b16 %v205
    %v254 = vpack.c.b16 %v239, %v238
    %v255 = vpack.c.b16 %v241, %v240
    %v256 = vpack.c.b16 %v243, %v242
    %v257 = vpack.c.b16 %v245, %v244
    %v258 = vpack.c.b16 %v247, %v246
    %v259 = vpack.c.b16 %v249, %v248
    %v260 = vpack.c.b16 %v251, %v250
    %v261 = vpack.c.b16 %v253, %v252
    %v286 = vunpack.c.l.b16 %v206
    %v287 = vunpack.c.l.b16 %v207
    %v288 = vunpack.c.l.b16 %v208
    %v289 = vunpack.c.l.b16 %v209
    %v290 = vunpack.c.l.b16 %v210
    %v291 = vunpack.c.l.b16 %v211
    %v292 = vunpack.c.l.b16 %v212
    %v293 = vunpack.c.l.b16 %v213
    %v294 = vunpack.c.l.b16 %v214
    %v295 = vunpack.c.l.b16 %v215
    %v296 = vunpack.c.l.b16 %v216
    %v297 = vunpack.c.l.b16 %v217
    %v298 = vunpack.c.l.b16 %v218
    %v299 = vunpack.c.l.b16 %v219
    %v300 = vunpack.c.l.b16 %v220
    %v301 = vunpack.c.l.b16 %v221
    %v302 = vpack.c.b16 %v287, %v286
    %v303 = vpack.c.b16 %v289, %v288
    %v304 = vpack.c.b16 %v291, %v290
    %v305 = vpack.c.b16 %v293, %v292
    %v306 = vpack.c.b16 %v295, %v294
    %v307 = vpack.c.b16 %v297, %v296
    %v308 = vpack.c.b16 %v299, %v298
    %v309 = vpack.c.b16 %v301, %v300
    %318 = vmatpush.bf16.msra.mxu0 %v309
    %319 = vmatpush.bf16.msra.mxu0 %v308
    %320 = vmatpush.bf16.msra.mxu0 %v307
    %321 = vmatpush.bf16.msra.mxu0 %v306
    %322 = vmatpush.bf16.msra.mxu0 %v305
    %323 = vmatpush.bf16.msra.mxu0 %v304
    %324 = vmatpush.bf16.msra.mxu0 %v303
    %325 = vmatpush.bf16.msra.mxu0 %v302
    %326 = vmatmul.bf16.gmra.mxu0 %v254
    %v327 = vpop.f32.mrf.mxu0
    %v328 = vadd.f32 0.0, %v327
    %v329 = vpop.f32.mrf.mxu0
    %v330 = vadd.f32 0.0, %v329
    %331 = vmatmul.bf16.gmra.mxu0 %v255
    %v332 = vpop.f32.mrf.mxu0
    %v333 = vadd.f32 0.0, %v332
    %v334 = vpop.f32.mrf.mxu0
    %v335 = vadd.f32 0.0, %v334
    %336 = vmatmul.bf16.gmra.mxu0 %v256
    %v337 = vpop.f32.mrf.mxu0
    %v338 = vadd.f32 0.0, %v337
    %v339 = vpop.f32.mrf.mxu0
    %v340 = vadd.f32 0.0, %v339
    %341 = vmatmul.bf16.gmra.mxu0 %v257
    %v342 = vpop.f32.mrf.mxu0
    %v343 = vadd.f32 0.0, %v342
    %v344 = vpop.f32.mrf.mxu0
    %v345 = vadd.f32 0.0, %v344
    %346 = vmatmul.bf16.gmra.mxu0 %v258
    %v347 = vpop.f32.mrf.mxu0
    %v348 = vadd.f32 0.0, %v347
    %v349 = vpop.f32.mrf.mxu0
    %v350 = vadd.f32 0.0, %v349
    %351 = vmatmul.bf16.gmra.mxu0 %v259
    %v352 = vpop.f32.mrf.mxu0
    %v353 = vadd.f32 0.0, %v352
    %v354 = vpop.f32.mrf.mxu0
    %v355 = vadd.f32 0.0, %v354
    %356 = vmatmul.bf16.gmra.mxu0 %v260
    %v357 = vpop.f32.mrf.mxu0
    %v358 = vadd.f32 0.0, %v357
    %v359 = vpop.f32.mrf.mxu0
    %v360 = vadd.f32 0.0, %v359
    %361 = vmatmul.bf16.gmra.mxu0 %v261
    %v362 = vpop.f32.mrf.mxu0
    %v363 = vadd.f32 0.0, %v362
    %v364 = vpop.f32.mrf.mxu0
    %v365 = vadd.f32 0.0, %v364
    %366 = vdwg.mxu0
    %v367 = vld [vmem:[#allocation2] sm:$0xf]
    %v368 = vld [vmem:[#allocation2 + $0x4] sm:$0xf]
    %v369 = vld [vmem:[#allocation2 + $0x8] sm:$0xf]
    %v370 = vld [vmem:[#allocation2 + $0xc] sm:$0xf]
    %v371 = vld [vmem:[#allocation2 + $0x10] sm:$0xf]
    %v372 = vld [vmem:[#allocation2 + $0x14] sm:$0xf]
    %v373 = vld [vmem:[#allocation2 + $0x18] sm:$0xf]
    %v374 = vld [vmem:[#allocation2 + $0x1c] sm:$0xf]
    %v375 = vld [vmem:[#allocation2 + $0x20] sm:$0xf]
    %v376 = vld [vmem:[#allocation2 + $0x24] sm:$0xf]
    %v377 = vld [vmem:[#allocation2 + $0x28] sm:$0xf]
    %v378 = vld [vmem:[#allocation2 + $0x2c] sm:$0xf]
    %v379 = vld [vmem:[#allocation2 + $0x30] sm:$0xf]
    %v380 = vld [vmem:[#allocation2 + $0x34] sm:$0xf]
    %v381 = vld [vmem:[#allocation2 + $0x38] sm:$0xf]
    %v382 = vld [vmem:[#allocation2 + $0x3c] sm:$0xf]
    %v383 = vpack.c.bf16 %v330, %v328
    %v384 = vpack.c.bf16 %v335, %v333
    %v385 = vpack.c.bf16 %v340, %v338
    %v386 = vpack.c.bf16 %v345, %v343
    %v387 = vpack.c.bf16 %v350, %v348
    %v388 = vpack.c.bf16 %v355, %v353
    %v389 = vpack.c.bf16 %v360, %v358
    %v390 = vpack.c.bf16 %v365, %v363
    %v391 = vld [vmem:[#allocation8] sm:$0x1]
    %v393 = vperm.slane %v391, 0
    %v411 = vunpack.c.l.b16 %v367
    %v412 = vunpack.c.l.b16 %v368
    %v413 = vunpack.c.l.b16 %v369
    %v414 = vunpack.c.l.b16 %v370
    %v415 = vunpack.c.l.b16 %v371
    %v416 = vunpack.c.l.b16 %v372
    %v417 = vunpack.c.l.b16 %v373
    %v418 = vunpack.c.l.b16 %v374
    %v419 = vunpack.c.l.b16 %v375
    %v420 = vunpack.c.l.b16 %v376
    %v421 = vunpack.c.l.b16 %v377
    %v422 = vunpack.c.l.b16 %v378
    %v423 = vunpack.c.l.b16 %v379
    %v424 = vunpack.c.l.b16 %v380
    %v425 = vunpack.c.l.b16 %v381
    %v426 = vunpack.c.l.b16 %v382
    %v427 = vpack.c.b16 %v412, %v411
    %v428 = vpack.c.b16 %v414, %v413
    %v429 = vpack.c.b16 %v416, %v415
    %v430 = vpack.c.b16 %v418, %v417
    %v431 = vpack.c.b16 %v420, %v419
    %v432 = vpack.c.b16 %v422, %v421
    %v433 = vpack.c.b16 %v424, %v423
    %v434 = vpack.c.b16 %v426, %v425
    %443 = vmatpush.bf16.msra.mxu0 %v390
    %444 = vmatpush.bf16.msra.mxu0 %v389
    %445 = vmatpush.bf16.msra.mxu0 %v388
    %446 = vmatpush.bf16.msra.mxu0 %v387
    %447 = vmatpush.bf16.msra.mxu0 %v386
    %448 = vmatpush.bf16.msra.mxu0 %v385
    %449 = vmatpush.bf16.msra.mxu0 %v384
    %450 = vmatpush.bf16.msra.mxu0 %v383
    %451 = vmatmul.bf16.gmra.mxu0 %v427
    %v452 = vpop.f32.mrf.mxu0
    %v453 = vadd.f32 %v393, %v452
    %v454 = vpop.f32.mrf.mxu0
    %v455 = vadd.f32 %v393, %v454
    %456 = vmatmul.bf16.gmra.mxu0 %v428
    %v457 = vpop.f32.mrf.mxu0
    %v458 = vadd.f32 %v393, %v457
    %v459 = vpop.f32.mrf.mxu0
    %v460 = vadd.f32 %v393, %v459
    %461 = vmatmul.bf16.gmra.mxu0 %v429
    %v462 = vpop.f32.mrf.mxu0
    %v463 = vadd.f32 %v393, %v462
    %v464 = vpop.f32.mrf.mxu0
    %v465 = vadd.f32 %v393, %v464
    %466 = vmatmul.bf16.gmra.mxu0 %v430
    %v467 = vpop.f32.mrf.mxu0
    %v468 = vadd.f32 %v393, %v467
    %v469 = vpop.f32.mrf.mxu0
    %v470 = vadd.f32 %v393, %v469
    %471 = vmatmul.bf16.gmra.mxu0 %v431
    %v472 = vpop.f32.mrf.mxu0
    %v473 = vadd.f32 %v393, %v472
    %v474 = vpop.f32.mrf.mxu0
    %v475 = vadd.f32 %v393, %v474
    %476 = vmatmul.bf16.gmra.mxu0 %v432
    %v477 = vpop.f32.mrf.mxu0
    %v478 = vadd.f32 %v393, %v477
    %v479 = vpop.f32.mrf.mxu0
    %v480 = vadd.f32 %v393, %v479
    %481 = vmatmul.bf16.gmra.mxu0 %v433
    %v482 = vpop.f32.mrf.mxu0
    %v483 = vadd.f32 %v393, %v482
    %v484 = vpop.f32.mrf.mxu0
    %v485 = vadd.f32 %v393, %v484
    %486 = vmatmul.bf16.gmra.mxu0 %v434
    %v487 = vpop.f32.mrf.mxu0
    %v488 = vadd.f32 %v393, %v487
    %v489 = vpop.f32.mrf.mxu0
    %v490 = vadd.f32 %v393, %v489
    %491 = vdwg.mxu0
    %v492 = vmax.f32 %v453, 0.0
    %v493 = vmax.f32 %v455, 0.0
    %v494 = vmax.f32 %v458, 0.0
    %v495 = vmax.f32 %v460, 0.0
    %v496 = vmax.f32 %v463, 0.0
    %v497 = vmax.f32 %v465, 0.0
    %v498 = vmax.f32 %v468, 0.0
    %v499 = vmax.f32 %v470, 0.0
    %v500 = vmax.f32 %v473, 0.0
    %v501 = vmax.f32 %v475, 0.0
    %v502 = vmax.f32 %v478, 0.0
    %v503 = vmax.f32 %v480, 0.0
    %v504 = vmax.f32 %v483, 0.0
    %v505 = vmax.f32 %v485, 0.0
    %v506 = vmax.f32 %v488, 0.0
    %v507 = vmax.f32 %v490, 0.0
    %v508 = vpack.c.bf16 %v493, %v492
    %v509 = vpack.c.bf16 %v495, %v494
    %v510 = vpack.c.bf16 %v497, %v496
    %v511 = vpack.c.bf16 %v499, %v498
    %v512 = vpack.c.bf16 %v501, %v500
    %v513 = vpack.c.bf16 %v503, %v502
    %v514 = vpack.c.bf16 %v505, %v504
    %v515 = vpack.c.bf16 %v507, %v506
    %v516 = vld [vmem:[#allocation10] sm:$0xf]
    %v517 = vld [vmem:[#allocation10 + $0x4] sm:$0xf]
    %v518 = vld [vmem:[#allocation10 + $0x8] sm:$0xf]
    %v519 = vld [vmem:[#allocation10 + $0xc] sm:$0xf]
    %v520 = vld [vmem:[#allocation10 + $0x10] sm:$0xf]
    %v521 = vld [vmem:[#allocation10 + $0x14] sm:$0xf]
    %v522 = vld [vmem:[#allocation10 + $0x18] sm:$0xf]
    %v523 = vld [vmem:[#allocation10 + $0x1c] sm:$0xf]
    %v524 = vld [vmem:[#allocation10 + $0x20] sm:$0xf]
    %v525 = vld [vmem:[#allocation10 + $0x24] sm:$0xf]
    %v526 = vld [vmem:[#allocation10 + $0x28] sm:$0xf]
    %v527 = vld [vmem:[#allocation10 + $0x2c] sm:$0xf]
    %v528 = vld [vmem:[#allocation10 + $0x30] sm:$0xf]
    %v529 = vld [vmem:[#allocation10 + $0x34] sm:$0xf]
    %v530 = vld [vmem:[#allocation10 + $0x38] sm:$0xf]
    %v531 = vld [vmem:[#allocation10 + $0x3c] sm:$0xf]
    %v548 = vunpack.c.l.b16 %v516
    %v549 = vunpack.c.l.b16 %v517
    %v550 = vunpack.c.l.b16 %v518
    %v551 = vunpack.c.l.b16 %v519
    %v552 = vunpack.c.l.b16 %v520
    %v553 = vunpack.c.l.b16 %v521
    %v554 = vunpack.c.l.b16 %v522
    %v555 = vunpack.c.l.b16 %v523
    %v556 = vunpack.c.l.b16 %v524
    %v557 = vunpack.c.l.b16 %v525
    %v558 = vunpack.c.l.b16 %v526
    %v559 = vunpack.c.l.b16 %v527
    %v560 = vunpack.c.l.b16 %v528
    %v561 = vunpack.c.l.b16 %v529
    %v562 = vunpack.c.l.b16 %v530
    %v563 = vunpack.c.l.b16 %v531
    %v564 = vpack.c.b16 %v549, %v548
    %v565 = vpack.c.b16 %v551, %v550
    %v566 = vpack.c.b16 %v553, %v552
    %v567 = vpack.c.b16 %v555, %v554
    %v568 = vpack.c.b16 %v557, %v556
    %v569 = vpack.c.b16 %v559, %v558
    %v570 = vpack.c.b16 %v561, %v560
    %v571 = vpack.c.b16 %v563, %v562
    %580 = vmatpush.bf16.msra.mxu0 %v571
    %581 = vmatpush.bf16.msra.mxu0 %v570
    %582 = vmatpush.bf16.msra.mxu0 %v569
    %583 = vmatpush.bf16.msra.mxu0 %v568
    %584 = vmatpush.bf16.msra.mxu0 %v567
    %585 = vmatpush.bf16.msra.mxu0 %v566
    %586 = vmatpush.bf16.msra.mxu0 %v565
    %587 = vmatpush.bf16.msra.mxu0 %v564
    %588 = vmatmul.bf16.gmra.mxu0 %v508
    %v589 = vpop.f32.mrf.mxu0
    %v590 = vadd.f32 0.0, %v589
    %v591 = vpop.f32.mrf.mxu0
    %v592 = vadd.f32 0.0, %v591
    %593 = vmatmul.bf16.gmra.mxu0 %v509
    %v594 = vpop.f32.mrf.mxu0
    %v595 = vadd.f32 0.0, %v594
    %v596 = vpop.f32.mrf.mxu0
    %v597 = vadd.f32 0.0, %v596
    %598 = vmatmul.bf16.gmra.mxu0 %v510
    %v599 = vpop.f32.mrf.mxu0
    %v600 = vadd.f32 0.0, %v599
    %v601 = vpop.f32.mrf.mxu0
    %v602 = vadd.f32 0.0, %v601
    %603 = vmatmul.bf16.gmra.mxu0 %v511
    %v604 = vpop.f32.mrf.mxu0
    %v605 = vadd.f32 0.0, %v604
    %v606 = vpop.f32.mrf.mxu0
    %v607 = vadd.f32 0.0, %v606
    %608 = vmatmul.bf16.gmra.mxu0 %v512
    %v609 = vpop.f32.mrf.mxu0
    %v610 = vadd.f32 0.0, %v609
    %v611 = vpop.f32.mrf.mxu0
    %v612 = vadd.f32 0.0, %v611
    %613 = vmatmul.bf16.gmra.mxu0 %v513
    %v614 = vpop.f32.mrf.mxu0
    %v615 = vadd.f32 0.0, %v614
    %v616 = vpop.f32.mrf.mxu0
    %v617 = vadd.f32 0.0, %v616
    %618 = vmatmul.bf16.gmra.mxu0 %v514
    %v619 = vpop.f32.mrf.mxu0
    %v620 = vadd.f32 0.0, %v619
    %v621 = vpop.f32.mrf.mxu0
    %v622 = vadd.f32 0.0, %v621
    %623 = vmatmul.bf16.gmra.mxu0 %v515
    %v624 = vpop.f32.mrf.mxu0
    %v625 = vadd.f32 0.0, %v624
    %v626 = vpop.f32.mrf.mxu0
    %v627 = vadd.f32 0.0, %v626
    %628 = vdwg.mxu0
    %v629 = vpack.c.bf16 %v592, %v590
    %v630 = vpack.c.bf16 %v597, %v595
    %v631 = vpack.c.bf16 %v602, %v600
    %v632 = vpack.c.bf16 %v607, %v605
    %v633 = vpack.c.bf16 %v612, %v610
    %v634 = vpack.c.bf16 %v617, %v615
    %v635 = vpack.c.bf16 %v622, %v620
    %v636 = vpack.c.bf16 %v627, %v625
    %v637 = vld [vmem:[#allocation11] sm:$0x1]
    %v639 = vperm.slane %v637, 0
    %641 = vmatpush.bf16.msra.mxu0 %v636
    %642 = vmatpush.bf16.msra.mxu0 %v635
    %643 = vmatpush.bf16.msra.mxu0 %v634
    %644 = vmatpush.bf16.msra.mxu0 %v633
    %645 = vmatpush.bf16.msra.mxu0 %v632
    %646 = vmatpush.bf16.msra.mxu0 %v631
    %647 = vmatpush.bf16.msra.mxu0 %v630
    %648 = vmatpush.bf16.msra.mxu0 %v629
    %649 = vmatmul.bf16.gmra.mxu0 %v427
    %v650 = vpop.f32.mrf.mxu0
    %v651 = vadd.f32 %v639, %v650
    %v652 = vpop.f32.mrf.mxu0
    %v653 = vadd.f32 %v639, %v652
    %654 = vmatmul.bf16.gmra.mxu0 %v428
    %v655 = vpop.f32.mrf.mxu0
    %v656 = vadd.f32 %v639, %v655
    %v657 = vpop.f32.mrf.mxu0
    %v658 = vadd.f32 %v639, %v657
    %659 = vmatmul.bf16.gmra.mxu0 %v429
    %v660 = vpop.f32.mrf.mxu0
    %v661 = vadd.f32 %v639, %v660
    %v662 = vpop.f32.mrf.mxu0
    %v663 = vadd.f32 %v639, %v662
    %664 = vmatmul.bf16.gmra.mxu0 %v430
    %v665 = vpop.f32.mrf.mxu0
    %v666 = vadd.f32 %v639, %v665
    %v667 = vpop.f32.mrf.mxu0
    %v668 = vadd.f32 %v639, %v667
    %669 = vmatmul.bf16.gmra.mxu0 %v431
    %v670 = vpop.f32.mrf.mxu0
    %v671 = vadd.f32 %v639, %v670
    %v672 = vpop.f32.mrf.mxu0
    %v673 = vadd.f32 %v639, %v672
    %674 = vmatmul.bf16.gmra.mxu0 %v432
    %v675 = vpop.f32.mrf.mxu0
    %v676 = vadd.f32 %v639, %v675
    %v677 = vpop.f32.mrf.mxu0
    %v678 = vadd.f32 %v639, %v677
    %679 = vmatmul.bf16.gmra.mxu0 %v433
    %v680 = vpop.f32.mrf.mxu0
    %v681 = vadd.f32 %v639, %v680
    %v682 = vpop.f32.mrf.mxu0
    %v683 = vadd.f32 %v639, %v682
    %684 = vmatmul.bf16.gmra.mxu0 %v434
    %v685 = vpop.f32.mrf.mxu0
    %v686 = vadd.f32 %v639, %v685
    %v687 = vpop.f32.mrf.mxu0
    %v688 = vadd.f32 %v639, %v687
    %689 = vdwg.mxu0
    %v690 = vmax.f32 %v651, 0.0
    %v691 = vmax.f32 %v653, 0.0
    %v692 = vmax.f32 %v656, 0.0
    %v693 = vmax.f32 %v658, 0.0
    %v694 = vmax.f32 %v661, 0.0
    %v695 = vmax.f32 %v663, 0.0
    %v696 = vmax.f32 %v666, 0.0
    %v697 = vmax.f32 %v668, 0.0
    %v698 = vmax.f32 %v671, 0.0
    %v699 = vmax.f32 %v673, 0.0
    %v700 = vmax.f32 %v676, 0.0
    %v701 = vmax.f32 %v678, 0.0
    %v702 = vmax.f32 %v681, 0.0
    %v703 = vmax.f32 %v683, 0.0
    %v704 = vmax.f32 %v686, 0.0
    %v705 = vmax.f32 %v688, 0.0
    %v706 = vpack.c.bf16 %v691, %v690
    %v707 = vpack.c.bf16 %v693, %v692
    %v708 = vpack.c.bf16 %v695, %v694
    %v709 = vpack.c.bf16 %v697, %v696
    %v710 = vpack.c.bf16 %v699, %v698
    %v711 = vpack.c.bf16 %v701, %v700
    %v712 = vpack.c.bf16 %v703, %v702
    %v713 = vpack.c.bf16 %v705, %v704
    %v714 = vld [vmem:[#allocation13] sm:$0xf]
    %v715 = vld [vmem:[#allocation13 + $0x4] sm:$0xf]
    %v716 = vld [vmem:[#allocation13 + $0x8] sm:$0xf]
    %v717 = vld [vmem:[#allocation13 + $0xc] sm:$0xf]
    %v718 = vld [vmem:[#allocation13 + $0x10] sm:$0xf]
    %v719 = vld [vmem:[#allocation13 + $0x14] sm:$0xf]
    %v720 = vld [vmem:[#allocation13 + $0x18] sm:$0xf]
    %v721 = vld [vmem:[#allocation13 + $0x1c] sm:$0xf]
    %v722 = vld [vmem:[#allocation13 + $0x20] sm:$0xf]
    %v723 = vld [vmem:[#allocation13 + $0x24] sm:$0xf]
    %v724 = vld [vmem:[#allocation13 + $0x28] sm:$0xf]
    %v725 = vld [vmem:[#allocation13 + $0x2c] sm:$0xf]
    %v726 = vld [vmem:[#allocation13 + $0x30] sm:$0xf]
    %v727 = vld [vmem:[#allocation13 + $0x34] sm:$0xf]
    %v728 = vld [vmem:[#allocation13 + $0x38] sm:$0xf]
    %v729 = vld [vmem:[#allocation13 + $0x3c] sm:$0xf]
    %v746 = vunpack.c.l.b16 %v714
    %v747 = vunpack.c.l.b16 %v715
    %v748 = vunpack.c.l.b16 %v716
    %v749 = vunpack.c.l.b16 %v717
    %v750 = vunpack.c.l.b16 %v718
    %v751 = vunpack.c.l.b16 %v719
    %v752 = vunpack.c.l.b16 %v720
    %v753 = vunpack.c.l.b16 %v721
    %v754 = vunpack.c.l.b16 %v722
    %v755 = vunpack.c.l.b16 %v723
    %v756 = vunpack.c.l.b16 %v724
    %v757 = vunpack.c.l.b16 %v725
    %v758 = vunpack.c.l.b16 %v726
    %v759 = vunpack.c.l.b16 %v727
    %v760 = vunpack.c.l.b16 %v728
    %v761 = vunpack.c.l.b16 %v729
    %v762 = vpack.c.b16 %v747, %v746
    %v763 = vpack.c.b16 %v749, %v748
    %v764 = vpack.c.b16 %v751, %v750
    %v765 = vpack.c.b16 %v753, %v752
    %v766 = vpack.c.b16 %v755, %v754
    %v767 = vpack.c.b16 %v757, %v756
    %v768 = vpack.c.b16 %v759, %v758
    %v769 = vpack.c.b16 %v761, %v760
    %778 = vmatpush.bf16.msra.mxu0 %v769
    %779 = vmatpush.bf16.msra.mxu0 %v768
    %780 = vmatpush.bf16.msra.mxu0 %v767
    %781 = vmatpush.bf16.msra.mxu0 %v766
    %782 = vmatpush.bf16.msra.mxu0 %v765
    %783 = vmatpush.bf16.msra.mxu0 %v764
    %784 = vmatpush.bf16.msra.mxu0 %v763
    %785 = vmatpush.bf16.msra.mxu0 %v762
    %786 = vmatmul.bf16.gmra.mxu0 %v706
    %v787 = vpop.f32.mrf.mxu0
    %v788 = vadd.f32 0.0, %v787
    %v789 = vpop.f32.mrf.mxu0
    %v790 = vadd.f32 0.0, %v789
    %791 = vmatmul.bf16.gmra.mxu0 %v707
    %v792 = vpop.f32.mrf.mxu0
    %v793 = vadd.f32 0.0, %v792
    %v794 = vpop.f32.mrf.mxu0
    %v795 = vadd.f32 0.0, %v794
    %796 = vmatmul.bf16.gmra.mxu0 %v708
    %v797 = vpop.f32.mrf.mxu0
    %v798 = vadd.f32 0.0, %v797
    %v799 = vpop.f32.mrf.mxu0
    %v800 = vadd.f32 0.0, %v799
    %801 = vmatmul.bf16.gmra.mxu0 %v709
    %v802 = vpop.f32.mrf.mxu0
    %v803 = vadd.f32 0.0, %v802
    %v804 = vpop.f32.mrf.mxu0
    %v805 = vadd.f32 0.0, %v804
    %806 = vmatmul.bf16.gmra.mxu0 %v710
    %v807 = vpop.f32.mrf.mxu0
    %v808 = vadd.f32 0.0, %v807
    %v809 = vpop.f32.mrf.mxu0
    %v810 = vadd.f32 0.0, %v809
    %811 = vmatmul.bf16.gmra.mxu0 %v711
    %v812 = vpop.f32.mrf.mxu0
    %v813 = vadd.f32 0.0, %v812
    %v814 = vpop.f32.mrf.mxu0
    %v815 = vadd.f32 0.0, %v814
    %816 = vmatmul.bf16.gmra.mxu0 %v712
    %v817 = vpop.f32.mrf.mxu0
    %v818 = vadd.f32 0.0, %v817
    %v819 = vpop.f32.mrf.mxu0
    %v820 = vadd.f32 0.0, %v819
    %821 = vmatmul.bf16.gmra.mxu0 %v713
    %v822 = vpop.f32.mrf.mxu0
    %v823 = vadd.f32 0.0, %v822
    %v824 = vpop.f32.mrf.mxu0
    %v825 = vadd.f32 0.0, %v824
    %826 = vdwg.mxu0
    %v827 = vpack.c.bf16 %v790, %v788
    %v828 = vpack.c.bf16 %v795, %v793
    %v829 = vpack.c.bf16 %v800, %v798
    %v830 = vpack.c.bf16 %v805, %v803
    %v831 = vpack.c.bf16 %v810, %v808
    %v832 = vpack.c.bf16 %v815, %v813
    %v833 = vpack.c.bf16 %v820, %v818
    %v834 = vpack.c.bf16 %v825, %v823
    %v835 = vld [vmem:[#allocation14] sm:$0x1]
    %v837 = vperm.slane %v835, 0
    %839 = vmatpush.bf16.msra.mxu0 %v834
    %840 = vmatpush.bf16.msra.mxu0 %v833
    %841 = vmatpush.bf16.msra.mxu0 %v832
    %842 = vmatpush.bf16.msra.mxu0 %v831
    %843 = vmatpush.bf16.msra.mxu0 %v830
    %844 = vmatpush.bf16.msra.mxu0 %v829
    %845 = vmatpush.bf16.msra.mxu0 %v828
    %846 = vmatpush.bf16.msra.mxu0 %v827
    %847 = vmatmul.bf16.gmra.mxu0 %v427
    %v848 = vpop.f32.mrf.mxu0
    %v849 = vadd.f32 %v837, %v848
    %v850 = vpop.f32.mrf.mxu0
    %v851 = vadd.f32 %v837, %v850
    %852 = vmatmul.bf16.gmra.mxu0 %v428
    %v853 = vpop.f32.mrf.mxu0
    %v854 = vadd.f32 %v837, %v853
    %v855 = vpop.f32.mrf.mxu0
    %v856 = vadd.f32 %v837, %v855
    %857 = vmatmul.bf16.gmra.mxu0 %v429
    %v858 = vpop.f32.mrf.mxu0
    %v859 = vadd.f32 %v837, %v858
    %v860 = vpop.f32.mrf.mxu0
    %v861 = vadd.f32 %v837, %v860
    %862 = vmatmul.bf16.gmra.mxu0 %v430
    %v863 = vpop.f32.mrf.mxu0
    %v864 = vadd.f32 %v837, %v863
    %v865 = vpop.f32.mrf.mxu0
    %v866 = vadd.f32 %v837, %v865
    %867 = vmatmul.bf16.gmra.mxu0 %v431
    %v868 = vpop.f32.mrf.mxu0
    %v869 = vadd.f32 %v837, %v868
    %v870 = vpop.f32.mrf.mxu0
    %v871 = vadd.f32 %v837, %v870
    %872 = vmatmul.bf16.gmra.mxu0 %v432
    %v873 = vpop.f32.mrf.mxu0
    %v874 = vadd.f32 %v837, %v873
    %v875 = vpop.f32.mrf.mxu0
    %v876 = vadd.f32 %v837, %v875
    %877 = vmatmul.bf16.gmra.mxu0 %v433
    %v878 = vpop.f32.mrf.mxu0
    %v879 = vadd.f32 %v837, %v878
    %v880 = vpop.f32.mrf.mxu0
    %v881 = vadd.f32 %v837, %v880
    %882 = vmatmul.bf16.gmra.mxu0 %v434
    %v883 = vpop.f32.mrf.mxu0
    %v884 = vadd.f32 %v837, %v883
    %v885 = vpop.f32.mrf.mxu0
    %v886 = vadd.f32 %v837, %v885
    %887 = vdwg.mxu0
    %v888 = vpack.c.bf16 %v851, %v849
    %v889 = vpack.c.bf16 %v856, %v854
    %v890 = vpack.c.bf16 %v861, %v859
    %v891 = vpack.c.bf16 %v866, %v864
    %v892 = vpack.c.bf16 %v871, %v869
    %v893 = vpack.c.bf16 %v876, %v874
    %v894 = vpack.c.bf16 %v881, %v879
    %v895 = vpack.c.bf16 %v886, %v884
    %v896 = vld [vmem:[#allocation16] sm:$0xf]
    %897 = vmatpush.bf16.msra.mxu0 %v895
    %898 = vmatpush.bf16.msra.mxu0 %v894
    %899 = vmatpush.bf16.msra.mxu0 %v893
    %900 = vmatpush.bf16.msra.mxu0 %v892
    %901 = vmatpush.bf16.msra.mxu0 %v891
    %902 = vmatpush.bf16.msra.mxu0 %v890
    %903 = vmatpush.bf16.msra.mxu0 %v889
    %904 = vmatpush.bf16.msra.mxu0 %v888
    %905 = vmatmul.bf16.gmra.mxu0 %v896
    %v906 = vpop.f32.mrf.mxu0
    %v907 = vadd.f32 0.0, %v906
    %v908 = vpop.f32.mrf.mxu0
    %909 = vdwg.mxu0
    %v910 = vld [vmem:[%s9] sm:$0xff]
    %v911 = vmul.f32 %v907, %v910
    %v912 = vld [vmem:[#allocation17] sm:$0xff]
    %v913 = vld [vmem:[#allocation17 + $0x8] sm:$0xff]
    %v914 = vld [vmem:[#allocation17 + $0x10] sm:$0xff]
    %v915 = vld [vmem:[#allocation17 + $0x18] sm:$0xff]
    %v916 = vld [vmem:[#allocation17 + $0x20] sm:$0xff]
    %v917 = vld [vmem:[#allocation17 + $0x28] sm:$0xff]
    %v918 = vld [vmem:[#allocation17 + $0x30] sm:$0xff]
    %v919 = vld [vmem:[#allocation17 + $0x38] sm:$0xff]
    %v920 = vld [vmem:[#allocation17 + $0x40] sm:$0xff]
    %v921 = vld [vmem:[#allocation17 + $0x48] sm:$0xff]
    %v922 = vld [vmem:[#allocation17 + $0x50] sm:$0xff]
    %v923 = vld [vmem:[#allocation17 + $0x58] sm:$0xff]
    %v924 = vld [vmem:[#allocation17 + $0x60] sm:$0xff]
    %v925 = vld [vmem:[#allocation17 + $0x68] sm:$0xff]
    %v926 = vld [vmem:[#allocation17 + $0x70] sm:$0xff]
    %v927 = vld [vmem:[#allocation17 + $0x78] sm:$0xff]
    %v928 = vld [vmem:[%s11] sm:$0x1]
    %v930 = vperm.slane %v928, 0
    %932 = vmatpush.msra.mxu0 %v927
    %933 = vmatpush.msra.mxu0 %v926
    %934 = vmatpush.msra.mxu0 %v925
    %935 = vmatpush.msra.mxu0 %v924
    %936 = vmatpush.msra.mxu0 %v923
    %937 = vmatpush.msra.mxu0 %v922
    %938 = vmatpush.msra.mxu0 %v921
    %939 = vmatpush.msra.mxu0 %v920
    %940 = vmatpush.msra.mxu0 %v919
    %941 = vmatpush.msra.mxu0 %v918
    %942 = vmatpush.msra.mxu0 %v917
    %943 = vmatpush.msra.mxu0 %v916
    %944 = vmatpush.msra.mxu0 %v915
    %945 = vmatpush.msra.mxu0 %v914
    %946 = vmatpush.msra.mxu0 %v913
    %947 = vmatpush.msra.mxu0 %v912
    %948 = vmatmul.f32.gmra.mxu0 %v911
    %v949 = vpop.f32.mrf.mxu0
    %v950 = vadd.f32 %v930, %v949
    %951 = vdwg.mxu0
    %952 = vst [vmem:[#allocation19] sm:$0xff] %v950
    // Predicated region
    $region90: #{tpu_custom_call.1} parent=1 // pred_check
      _
    $region91: #{tpu_custom_call.1} parent=1 // pred_check_branch
      %954 = sbr.rel (0) target = $region93
    $region92: #{tpu_custom_call.1} parent=1 // pred_region
      %956 = vsyncadd [#allocation4], 0
      %s958 = sshll.u32 [#allocation19], 4
      %s959 = int_to_ptr.vmem [resolvable:$true] %s958
      %s960 = sshll.u32 %s12, 4
      %s961 = int_to_ptr.hbm [resolvable:$true] %s960
      %963 = dma.vmem_to_hbm [thread:$0]  %s959, 128, %s961, [#allocation4]
    $region93: #{tpu_custom_call.1} parent=1 // pred_fallthru
      _
    // Predicated region
    $region94: #{tpu_custom_call.1} parent=1 // pred_check
      _
    $region95: #{tpu_custom_call.1} parent=1 // pred_check_branch
      %965 = sbr.rel (0) target = $region97
    $region96: #{tpu_custom_call.1} parent=1 // pred_region
      %967 = dma.done [#allocation4], 128
    $region97: #{tpu_custom_call.1} parent=1 // pred_fallthru
      _
    %968 = vsyncpa [#allocation3], 1
    %969 = vsyncpa [#allocation6], 1
    %970 = vsyncpa [#allocation9], 1
    %971 = vsyncpa [#allocation12], 1
    %972 = vsyncpa [#allocation15], 1
    %973 = vsyncpa [#allocation18], 1
    %974 = vsyncpa [#allocation4], 1

</llo_original>
